<compile_context>
chip_gen: v5e
topology: v5e:2x2
jax: 0.10.0
libtpu: 0.0.40
codegen_flags: <defaults>
</compile_context>

<pallas_src>
from functools import partial

import numpy as np
import jax
import jax.numpy as jnp
from jax.experimental import pallas as pl
from jax.experimental.pallas import tpu as pltpu

HEAD_PAD = 128   # lane-dense output slab width (multiple of 128 lanes)
ROW_PAD = 8      # sublane alignment for the output rows


def _vmem():
    return pl.BlockSpec(memory_space=pltpu.MemorySpace.VMEM)


# ----------------------------- in-kernel helpers ---------------------------- #

def _bf16(x):
    return x.astype(jnp.bfloat16)


def _gcn_two_layers(x, adj, w1, b1, w2, b2):
    """Two vanilla GCNConv layers (normalize=False, no self loops):
       relu(A @ (X @ W1) + b1) -> relu(A @ (h @ W2) + b2).
       bf16 operands on the MXU, f32 accumulation, f32 bias/relu epilogue."""
    a = _bf16(adj)
    h = jnp.dot(_bf16(x), _bf16(w1), preferred_element_type=jnp.float32)
    h = jnp.dot(a, _bf16(h), preferred_element_type=jnp.float32) + b1
    h = jnp.maximum(h, 0.0)                       # relu_between_gcn_layers
    h = jnp.dot(_bf16(h), _bf16(w2), preferred_element_type=jnp.float32)
    h = jnp.dot(a, _bf16(h), preferred_element_type=jnp.float32) + b2
    return jnp.maximum(h, 0.0)                    # relu after last layer


def _gather_rows(idx_col, table):
    """Row gather done on the MXU: one_hot(idx) @ table.
       idx_col: [M, 1] int32 (VMEM); table: [R, D] f32 (VMEM-resident value)."""
    m = idx_col.shape[0]
    r = table.shape[0]
    iota = jax.lax.broadcasted_iota(jnp.int32, (m, r), 1)
    sel = jnp.where(iota == idx_col, 1.0, 0.0)    # exact in bf16
    return jnp.dot(_bf16(sel), _bf16(table), preferred_element_type=jnp.float32)


def _dueling_tail(h1, w2, b2, wav, bav, n_actions):
    """Second hidden layer + fused adv|val head + dueling combine.
       wav/bav are lane-padded to HEAD_PAD (cols [0:n_actions]=adv, [n_actions]=val),
       so the single head matmul and the output store are lane-dense."""
    h = jnp.dot(_bf16(h1), _bf16(w2), preferred_element_type=jnp.float32) + b2
    h = jnp.maximum(h, 0.0)
    av = jnp.dot(_bf16(h), _bf16(wav), preferred_element_type=jnp.float32) + bav  # [M, HEAD_PAD]
    lane = jax.lax.broadcasted_iota(jnp.int32, av.shape, 1)
    adv_mask = jnp.where(lane < n_actions, 1.0, 0.0)
    val = jnp.sum(jnp.where(lane == n_actions, av, 0.0), axis=-1, keepdims=True)
    adv_mean = jnp.sum(av * adv_mask, axis=-1, keepdims=True) * (1.0 / n_actions)
    q = av + val - adv_mean                       # Q = V + A - mean(A)
    return jnp.where(lane < n_actions, q, 0.0)    # lane-dense padded slab


# ---------------------------------- kernels --------------------------------- #

def _mm_fused_kernel(src_ref, rtyp_ref, dst_ref,
                     ent_ref, rel_ref, adj_ref,
                     gw1_ref, gb1_ref, gw2_ref, gb2_ref,
                     w1a_ref, w1b_ref, w1c_ref, b1_ref,
                     w2_ref, b2_ref, wav_ref, bav_ref,
                     out_ref, *, n_actions):
    # GCN stack — node features stay in VMEM/vregs (never round-trip HBM).
    ent = _gcn_two_layers(ent_ref[...], adj_ref[...],
                          gw1_ref[...], gb1_ref[...], gw2_ref[...], gb2_ref[...])
    # Triple gather (src, rel, dst) via one-hot MXU matmuls.
    src = _gather_rows(src_ref[...], ent)
    rq = _gather_rows(rtyp_ref[...], rel_ref[...])
    dst = _gather_rows(dst_ref[...], ent)
    # First MLP layer with W1 pre-split into three D-wide blocks (no [M,3D] concat).
    h = (jnp.dot(_bf16(src), _bf16(w1a_ref[...]), preferred_element_type=jnp.float32)
         + jnp.dot(_bf16(rq), _bf16(w1b_ref[...]), preferred_element_type=jnp.float32)
         + jnp.dot(_bf16(dst), _bf16(w1c_ref[...]), preferred_element_type=jnp.float32)
         + b1_ref[...])
    h = jnp.maximum(h, 0.0)
    out_ref[...] = _dueling_tail(h, w2_ref[...], b2_ref[...],
                                 wav_ref[...], bav_ref[...], n_actions)


def _explore_fused_kernel(agent_ref, ent_ref, adj_ref,
                          gw1_ref, gb1_ref, gw2_ref, gb2_ref,
                          w1_ref, b1_ref, w2_ref, b2_ref, wav_ref, bav_ref,
                          out_ref, *, n_actions):
    ent = _gcn_two_layers(ent_ref[...], adj_ref[...],
                          gw1_ref[...], gb1_ref[...], gw2_ref[...], gb2_ref[...])
    node = _gather_rows(agent_ref[...], ent)
    h = jnp.dot(_bf16(node), _bf16(w1_ref[...]),
                preferred_element_type=jnp.float32) + b1_ref[...]
    h = jnp.maximum(h, 0.0)
    out_ref[...] = _dueling_tail(h, w2_ref[...], b2_ref[...],
                                 wav_ref[...], bav_ref[...], n_actions)


# ------------------------------ jitted wrappers ------------------------------ #

def _pad_idx_rows(idx, row_pad):
    """Pad an index vector to a multiple of `row_pad` rows (pads with row 0)."""
    m = idx.shape[0]
    pad = (-m) % row_pad
    if pad:
        idx = jnp.concatenate([idx, jnp.zeros((pad,), idx.dtype)], axis=0)
    return idx


@partial(jax.jit, static_argnames=("n_actions",))
def fused_mm_forward(params, ent, rel, adj, src_idx, rtyp_idx, dst_idx, *, n_actions):
    m = src_idx.shape[0]
    src_p = _pad_idx_rows(src_idx.astype(jnp.int32), ROW_PAD)
    rtyp_p = _pad_idx_rows(rtyp_idx.astype(jnp.int32), ROW_PAD)
    dst_p = _pad_idx_rows(dst_idx.astype(jnp.int32), ROW_PAD)
    m_pad = src_p.shape[0]
    gw1, gb1, gw2, gb2 = params["gcn"]
    w1a, w1b, w1c, b1, w2, b2, wav, bav = params["mlp_mm"]
    q_pad = pl.pallas_call(
        partial(_mm_fused_kernel, n_actions=n_actions),
        out_shape=jax.ShapeDtypeStruct((m_pad, HEAD_PAD), jnp.float32),
        in_specs=[_vmem()] * 18,
        out_specs=_vmem(),
    )(src_p.reshape(m_pad, 1), rtyp_p.reshape(m_pad, 1), dst_p.reshape(m_pad, 1),
      ent, rel, adj,
      gw1, gb1, gw2, gb2,
      w1a, w1b, w1c, b1, w2, b2, wav, bav)
    return q_pad[:m, :n_actions]


@partial(jax.jit, static_argnames=("n_actions",))
def fused_explore_forward(params, ent, adj, agent_idx, *, n_actions):
    b = agent_idx.shape[0]
    agent_p = _pad_idx_rows(agent_idx.astype(jnp.int32), ROW_PAD)
    b_pad = agent_p.shape[0]
    gw1, gb1, gw2, gb2 = params["gcn"]
    w1, b1, w2, b2, wav, bav = params["mlp_explore"]
    q_pad = pl.pallas_call(
        partial(_explore_fused_kernel, n_actions=n_actions),
        out_shape=jax.ShapeDtypeStruct((b_pad, HEAD_PAD), jnp.float32),
        in_specs=[_vmem()] * 13,
        out_specs=_vmem(),
    )(agent_p.reshape(b_pad, 1),
      ent, adj,
      gw1, gb1, gw2, gb2,
      w1, b1, w2, b2, wav, bav)
    return q_pad[:b, :n_actions]


# ------------------------------ parameter init ------------------------------- #

def xavier_normal(key, shape):
    fan_in, fan_out = shape
    std = float(np.sqrt(2.0 / (fan_in + fan_out)))
    return std * jax.random.normal(key, shape, dtype=jnp.float32)


def make_mlp_params(key, input_size, hidden_size, n_actions, split_first=1):
    """Dueling-DQN MLP params, pre-packed for the fused kernel:
       - W1 optionally split into `split_first` equal input blocks,
       - adv/val heads fused and lane-padded to [H, HEAD_PAD] / [1, HEAD_PAD]."""
    ks = jax.random.split(key, 4)
    w1 = xavier_normal(ks[0], (input_size, hidden_size))
    b1 = jnp.zeros((1, hidden_size), jnp.float32)
    w2 = xavier_normal(ks[1], (hidden_size, hidden_size))
    b2 = jnp.zeros((1, hidden_size), jnp.float32)
    wa = xavier_normal(ks[2], (hidden_size, n_actions))
    ba = jnp.zeros((1, n_actions), jnp.float32)
    wv = xavier_normal(ks[3], (hidden_size, 1))
    bv = jnp.zeros((1, 1), jnp.float32)
    wav = jnp.zeros((hidden_size, HEAD_PAD), jnp.float32)
    wav = wav.at[:, :n_actions].set(wa).at[:, n_actions:n_actions + 1].set(wv)
    bav = jnp.zeros((1, HEAD_PAD), jnp.float32)
    bav = bav.at[:, :n_actions].set(ba).at[:, n_actions:n_actions + 1].set(bv)
    if split_first > 1:
        d = input_size // split_first
        w1_parts = tuple(w1[i * d:(i + 1) * d] for i in range(split_first))
        return (*w1_parts, b1, w2, b2, wav, bav)
    return (w1, b1, w2, b2, wav, bav)


# ------------------------------ forward wrapper ------------------------------ #

def gnn_forward(params, graph, policy_type):
    ent = graph["entity_embeddings"]      # [N, D] jnp
    rel = graph["relation_embeddings"]    # [Rb, D] jnp
    adj = graph["adj"]                    # [N, N] jnp, A[dst, src] = multiplicity

    if policy_type == "mm":
        smi = graph["short_memory_idx"]                       # numpy [M]
        src_idx = graph["edge_idx"][0, smi]                   # numpy [M]
        dst_idx = graph["edge_idx"][1, smi]                   # numpy [M]
        rtyp_idx = graph["edge_type"][smi]                    # numpy [M]
        q = fused_mm_forward(params, ent, rel, adj,
                             jnp.asarray(src_idx), jnp.asarray(rtyp_idx),
                             jnp.asarray(dst_idx), n_actions=3)      # [M, 3]
        nums = graph["num_short_memories"]
        starts = np.concatenate([[0], np.cumsum(nums)[:-1]])
        return [q[int(s):int(s) + int(n)] for s, n in zip(starts, nums)]
    elif policy_type == "explore":
        q = fused_explore_forward(params, ent, adj,
                                  jnp.asarray(graph["agent_entity_idx"]),
                                  n_actions=5)                        # [B, 5]
        return [q[i:i + 1] for i in range(q.shape[0])]
    else:
        raise ValueError(f"{policy_type} is not a valid policy type.")


# --------------------------- pure-numpy reference ---------------------------- #

def reference_forward(params, graph, policy_type):
    ent = np.asarray(graph["entity_embeddings"], np.float32)
    rel = np.asarray(graph["relation_embeddings"], np.float32)
    adj = np.asarray(graph["adj"], np.float32)
    gw1, gb1, gw2, gb2 = [np.asarray(p, np.float32) for p in params["gcn"]]
    h = np.maximum(adj @ (ent @ gw1) + gb1, 0.0)
    ent2 = np.maximum(adj @ (h @ gw2) + gb2, 0.0)

    def mlp(x, p, n_actions, split):
        p = [np.asarray(t, np.float32) for t in p]
        if split:
            w1 = np.concatenate(p[:3], axis=0)
            b1, w2, b2, wav, bav = p[3:]
        else:
            w1, b1, w2, b2, wav, bav = p
        hh = np.maximum(x @ w1 + b1, 0.0)
        hh = np.maximum(hh @ w2 + b2, 0.0)
        av = hh @ wav + bav
        adv = av[:, :n_actions]
        val = av[:, n_actions:n_actions + 1]
        return val + adv - adv.mean(axis=-1, keepdims=True)

    if policy_type == "mm":
        smi = graph["short_memory_idx"]
        src = ent2[graph["edge_idx"][0, smi]]
        rq = rel[graph["edge_type"][smi]]
        dst = ent2[graph["edge_idx"][1, smi]]
        return mlp(np.concatenate([src, rq, dst], axis=-1), params["mlp_mm"], 3, True)
    else:
        node = ent2[graph["agent_entity_idx"]]
        return mlp(node, params["mlp_explore"], 5, False)


# ----------------------------------- main ------------------------------------ #

if __name__ == "__main__":
    key = jax.random.PRNGKey(0)
    k_ent, k_phase, k_g1, k_g2, k_mm, k_ex = jax.random.split(key, 6)

    D = 8                       # embedding_dim
    NUM_ENT_VOCAB = 16
    NUM_REL_VOCAB = 8

    # entity embeddings (xavier normal) and rotational relation embeddings
    entity_vocab = xavier_normal(k_ent, (NUM_ENT_VOCAB, D))
    phases = 2.0 * np.pi * jax.random.uniform(k_phase, (NUM_REL_VOCAB, D // 2))
    rel_fwd = jnp.concatenate([jnp.cos(phases), jnp.sin(phases)], axis=-1)
    rel_inv = jnp.concatenate([jnp.cos(phases), -jnp.sin(phases)], axis=-1)
    relation_vocab = jnp.concatenate([rel_fwd, rel_inv], axis=0)  # [2R, D]

    # GCN layer weights (2 layers, glorot weight, zero bias)
    w1 = xavier_normal(k_g1, (D, D)); b1 = jnp.zeros((1, D), jnp.float32)
    w2 = xavier_normal(k_g2, (D, D)); b2 = jnp.zeros((1, D), jnp.float32)

    params = {
        "gcn": (w1, b1, w2, b2),
        "mlp_mm": make_mlp_params(k_mm, input_size=3 * D, hidden_size=D,
                                  n_actions=3, split_first=3),
        "mlp_explore": make_mlp_params(k_ex, input_size=D, hidden_size=D,
                                       n_actions=5, split_first=1),
    }

    # ---- synthetic batched graph (simulates process_batch / process_graph) ----
    # 2 samples, 8 entities and 4 relations each, 6 forward edges each.
    samples = [
        dict(ent_ids=list(range(0, 8)), rel_ids=[0, 1, 2, 3],
             edges=[(0, 1, 0), (1, 2, 1), (2, 3, 2), (3, 0, 3), (4, 5, 0), (5, 6, 1)],
             short_mem=[3, 4, 5], agent=0),
        dict(ent_ids=list(range(4, 12)), rel_ids=[2, 3, 4, 5],
             edges=[(0, 2, 0), (2, 4, 1), (4, 6, 2), (6, 0, 3), (1, 3, 0), (3, 5, 1)],
             short_mem=[2, 3, 4], agent=7),
    ]

    ent_rows, rel_rows_f, rel_rows_i = [], [], []
    edge_src_f, edge_dst_f, edge_type_f = [], [], []
    edge_src_i, edge_dst_i, edge_type_i = [], [], []
    short_mem_idx, agent_idx, num_short = [], [], []
    ent_off, rel_off, edge_off = 0, 0, 0
    for s in samples:
        ent_rows.extend(s["ent_ids"])
        rel_rows_f.extend(s["rel_ids"])
        rel_rows_i.extend([r + NUM_REL_VOCAB for r in s["rel_ids"]])
        for (src, dst, r) in s["edges"]:
            edge_src_f.append(src + ent_off); edge_dst_f.append(dst + ent_off)
            edge_type_f.append(r + rel_off)
            edge_src_i.append(dst + ent_off); edge_dst_i.append(src + ent_off)
            edge_type_i.append(r + rel_off)
        short_mem_idx.extend([e + edge_off for e in s["short_mem"]])
        num_short.append(len(s["short_mem"]))
        agent_idx.append(s["agent"] + ent_off)
        ent_off += len(s["ent_ids"])
        rel_off += len(s["rel_ids"])
        edge_off += len(s["edges"])

    n_fwd_ent, n_fwd_rel = ent_off, rel_off
    N = 2 * n_fwd_ent                     # forward + inverse copies of nodes

    entity_embeddings = jnp.concatenate(
        [entity_vocab[np.array(ent_rows)], entity_vocab[np.array(ent_rows)]], axis=0)
    relation_embeddings = jnp.concatenate(
        [relation_vocab[np.array(rel_rows_f)], relation_vocab[np.array(rel_rows_i)]], axis=0)

    edge_idx = np.stack([
        np.array(edge_src_f + [s + n_fwd_ent for s in edge_src_i], dtype=np.int32),
        np.array(edge_dst_f + [d + n_fwd_ent for d in edge_dst_i], dtype=np.int32),
    ], axis=0)                                                   # [2, 2*E_fwd]
    edge_type = np.array(edge_type_f + [t + n_fwd_rel for t in edge_type_i],
                         dtype=np.int32)                         # [2*E_fwd]

    adj = np.zeros((N, N), dtype=np.float32)
    for e in range(edge_idx.shape[1]):
        adj[edge_idx[1, e], edge_idx[0, e]] += 1.0               # message src->dst

    graph = {
        "entity_embeddings": entity_embeddings.astype(jnp.float32),     # [32, 8]
        "relation_embeddings": relation_embeddings.astype(jnp.float32),  # [16, 8]
        "edge_idx": edge_idx,                                            # numpy, host-side indexing
        "edge_type": edge_type,                                          # numpy
        "adj": jnp.asarray(adj),                                         # [32, 32]
        "short_memory_idx": np.array(short_mem_idx, dtype=np.int32),     # numpy
        "num_short_memories": np.array(num_short, dtype=np.int32),       # numpy
        "agent_entity_idx": np.array(agent_idx, dtype=np.int32),         # numpy
    }

    q_mm = gnn_forward(params, graph, "mm")
    q_explore = gnn_forward(params, graph, "explore")
    jax.block_until_ready(q_mm + q_explore)

    # sanity check vs. pure-f32 numpy reference (kernel uses bf16 MXU operands)
    q_mm_flat = np.concatenate([np.asarray(q) for q in q_mm], axis=0)
    q_ex_flat = np.concatenate([np.asarray(q) for q in q_explore], axis=0)
    ref_mm = reference_forward(params, graph, "mm")
    ref_ex = reference_forward(params, graph, "explore")
    assert np.allclose(q_mm_flat, ref_mm, atol=5e-2, rtol=5e-2), \
        float(np.abs(q_mm_flat - ref_mm).max())
    assert np.allclose(q_ex_flat, ref_ex, atol=5e-2, rtol=5e-2), \
        float(np.abs(q_ex_flat - ref_ex).max())

    assert len(q_mm) == 2 and q_mm[0].shape == (3, 3) and q_mm[1].shape == (3, 3)
    assert len(q_explore) == 2 and all(q.shape == (1, 5) for q in q_explore)
    print("KERNEL_OK")
</pallas_src>

<mosaic_0001>
module attributes {stable_mosaic.version = 11 : i64} {
  func.func @_mm_fused_kernel(%arg0: memref<8x1xi32, #tpu.memory_space<vmem>>, %arg1: memref<8x1xi32, #tpu.memory_space<vmem>>, %arg2: memref<8x1xi32, #tpu.memory_space<vmem>>, %arg3: memref<32x8xf32, #tpu.memory_space<vmem>>, %arg4: memref<16x8xf32, #tpu.memory_space<vmem>>, %arg5: memref<32x32xf32, #tpu.memory_space<vmem>>, %arg6: memref<8x8xf32, #tpu.memory_space<vmem>>, %arg7: memref<1x8xf32, #tpu.memory_space<vmem>>, %arg8: memref<8x8xf32, #tpu.memory_space<vmem>>, %arg9: memref<1x8xf32, #tpu.memory_space<vmem>>, %arg10: memref<8x8xf32, #tpu.memory_space<vmem>>, %arg11: memref<8x8xf32, #tpu.memory_space<vmem>>, %arg12: memref<8x8xf32, #tpu.memory_space<vmem>>, %arg13: memref<1x8xf32, #tpu.memory_space<vmem>>, %arg14: memref<8x8xf32, #tpu.memory_space<vmem>>, %arg15: memref<1x8xf32, #tpu.memory_space<vmem>>, %arg16: memref<8x128xf32, #tpu.memory_space<vmem>>, %arg17: memref<1x128xf32, #tpu.memory_space<vmem>>, %arg18: memref<8x128xf32, #tpu.memory_space<vmem>>) attributes {dimension_semantics = [], scalar_prefetch = 0 : i64, scratch_operands = 0 : i64, tpu.core_type = #tpu.core_type<tc>} {
    %c0 = arith.constant 0 : index
    %c0_0 = arith.constant 0 : index
    %0 = vector.load %arg3[%c0, %c0_0] : memref<32x8xf32, #tpu.memory_space<vmem>>, vector<32x8xf32>
    %c0_1 = arith.constant 0 : index
    %c0_2 = arith.constant 0 : index
    %1 = vector.load %arg5[%c0_1, %c0_2] : memref<32x32xf32, #tpu.memory_space<vmem>>, vector<32x32xf32>
    %c0_3 = arith.constant 0 : index
    %c0_4 = arith.constant 0 : index
    %2 = vector.load %arg6[%c0_3, %c0_4] : memref<8x8xf32, #tpu.memory_space<vmem>>, vector<8x8xf32>
    %c0_5 = arith.constant 0 : index
    %c0_6 = arith.constant 0 : index
    %3 = vector.load %arg7[%c0_5, %c0_6] : memref<1x8xf32, #tpu.memory_space<vmem>>, vector<1x8xf32>
    %c0_7 = arith.constant 0 : index
    %c0_8 = arith.constant 0 : index
    %4 = vector.load %arg8[%c0_7, %c0_8] : memref<8x8xf32, #tpu.memory_space<vmem>>, vector<8x8xf32>
    %c0_9 = arith.constant 0 : index
    %c0_10 = arith.constant 0 : index
    %5 = vector.load %arg9[%c0_9, %c0_10] : memref<1x8xf32, #tpu.memory_space<vmem>>, vector<1x8xf32>
    %6 = arith.truncf %1 : vector<32x32xf32> to vector<32x32xbf16>
    %7 = arith.truncf %0 : vector<32x8xf32> to vector<32x8xbf16>
    %8 = arith.truncf %2 : vector<8x8xf32> to vector<8x8xbf16>
    %cst = arith.constant dense<0.000000e+00> : vector<32x8xf32>
    %9 = tpu.matmul %7, %8, %cst {dimension_numbers = #tpu.dot_dimension_numbers<[1], [0], [0], [1], [0, 0, 1, 1], [], []>} : vector<32x8xbf16>, vector<8x8xbf16>, vector<32x8xf32> -> vector<32x8xf32>
    %10 = arith.truncf %9 : vector<32x8xf32> to vector<32x8xbf16>
    %cst_11 = arith.constant dense<0.000000e+00> : vector<32x8xf32>
    %11 = tpu.matmul %6, %10, %cst_11 {dimension_numbers = #tpu.dot_dimension_numbers<[1], [0], [0], [1], [0, 0, 1, 1], [], []>} : vector<32x32xbf16>, vector<32x8xbf16>, vector<32x8xf32> -> vector<32x8xf32>
    %12 = vector.broadcast %3 : vector<1x8xf32> to vector<32x8xf32>
    %13 = arith.addf %11, %12 : vector<32x8xf32>
    %cst_12 = arith.constant 0.000000e+00 : f32
    %14 = vector.broadcast %cst_12 : f32 to vector<32x8xf32>
    %15 = arith.maximumf %13, %14 : vector<32x8xf32>
    %16 = arith.truncf %15 : vector<32x8xf32> to vector<32x8xbf16>
    %17 = arith.truncf %4 : vector<8x8xf32> to vector<8x8xbf16>
    %cst_13 = arith.constant dense<0.000000e+00> : vector<32x8xf32>
    %18 = tpu.matmul %16, %17, %cst_13 {dimension_numbers = #tpu.dot_dimension_numbers<[1], [0], [0], [1], [0, 0, 1, 1], [], []>} : vector<32x8xbf16>, vector<8x8xbf16>, vector<32x8xf32> -> vector<32x8xf32>
    %19 = arith.truncf %18 : vector<32x8xf32> to vector<32x8xbf16>
    %cst_14 = arith.constant dense<0.000000e+00> : vector<32x8xf32>
    %20 = tpu.matmul %6, %19, %cst_14 {dimension_numbers = #tpu.dot_dimension_numbers<[1], [0], [0], [1], [0, 0, 1, 1], [], []>} : vector<32x32xbf16>, vector<32x8xbf16>, vector<32x8xf32> -> vector<32x8xf32>
    %21 = vector.broadcast %5 : vector<1x8xf32> to vector<32x8xf32>
    %22 = arith.addf %20, %21 : vector<32x8xf32>
    %cst_15 = arith.constant 0.000000e+00 : f32
    %23 = vector.broadcast %cst_15 : f32 to vector<32x8xf32>
    %24 = arith.maximumf %22, %23 : vector<32x8xf32>
    %c0_16 = arith.constant 0 : index
    %c0_17 = arith.constant 0 : index
    %25 = vector.load %arg0[%c0_16, %c0_17] : memref<8x1xi32, #tpu.memory_space<vmem>>, vector<8x1xi32>
    %26 = tpu.iota {dimensions = array<i32: 1>} : vector<8x32xi32>
    %27 = vector.broadcast %25 : vector<8x1xi32> to vector<8x32xi32>
    %28 = arith.cmpi eq, %26, %27 : vector<8x32xi32>
    %cst_18 = arith.constant 1.000000e+00 : f32
    %cst_19 = arith.constant 0.000000e+00 : f32
    %29 = vector.broadcast %cst_18 : f32 to vector<8x32xf32>
    %30 = vector.broadcast %cst_19 : f32 to vector<8x32xf32>
    %31 = arith.select %28, %29, %30 : vector<8x32xi1>, vector<8x32xf32>
    %32 = arith.truncf %31 : vector<8x32xf32> to vector<8x32xbf16>
    %33 = arith.truncf %24 : vector<32x8xf32> to vector<32x8xbf16>
    %cst_20 = arith.constant dense<0.000000e+00> : vector<8x8xf32>
    %34 = tpu.matmul %32, %33, %cst_20 {dimension_numbers = #tpu.dot_dimension_numbers<[1], [0], [0], [1], [0, 0, 1, 1], [], []>} : vector<8x32xbf16>, vector<32x8xbf16>, vector<8x8xf32> -> vector<8x8xf32>
    %c0_21 = arith.constant 0 : index
    %c0_22 = arith.constant 0 : index
    %35 = vector.load %arg1[%c0_21, %c0_22] : memref<8x1xi32, #tpu.memory_space<vmem>>, vector<8x1xi32>
    %c0_23 = arith.constant 0 : index
    %c0_24 = arith.constant 0 : index
    %36 = vector.load %arg4[%c0_23, %c0_24] : memref<16x8xf32, #tpu.memory_space<vmem>>, vector<16x8xf32>
    %37 = tpu.iota {dimensions = array<i32: 1>} : vector<8x16xi32>
    %38 = vector.broadcast %35 : vector<8x1xi32> to vector<8x16xi32>
    %39 = arith.cmpi eq, %37, %38 : vector<8x16xi32>
    %cst_25 = arith.constant 1.000000e+00 : f32
    %cst_26 = arith.constant 0.000000e+00 : f32
    %40 = vector.broadcast %cst_25 : f32 to vector<8x16xf32>
    %41 = vector.broadcast %cst_26 : f32 to vector<8x16xf32>
    %42 = arith.select %39, %40, %41 : vector<8x16xi1>, vector<8x16xf32>
    %43 = arith.truncf %42 : vector<8x16xf32> to vector<8x16xbf16>
    %44 = arith.truncf %36 : vector<16x8xf32> to vector<16x8xbf16>
    %cst_27 = arith.constant dense<0.000000e+00> : vector<8x8xf32>
    %45 = tpu.matmul %43, %44, %cst_27 {dimension_numbers = #tpu.dot_dimension_numbers<[1], [0], [0], [1], [0, 0, 1, 1], [], []>} : vector<8x16xbf16>, vector<16x8xbf16>, vector<8x8xf32> -> vector<8x8xf32>
    %c0_28 = arith.constant 0 : index
    %c0_29 = arith.constant 0 : index
    %46 = vector.load %arg2[%c0_28, %c0_29] : memref<8x1xi32, #tpu.memory_space<vmem>>, vector<8x1xi32>
    %47 = tpu.iota {dimensions = array<i32: 1>} : vector<8x32xi32>
    %48 = vector.broadcast %46 : vector<8x1xi32> to vector<8x32xi32>
    %49 = arith.cmpi eq, %47, %48 : vector<8x32xi32>
    %cst_30 = arith.constant 1.000000e+00 : f32
    %cst_31 = arith.constant 0.000000e+00 : f32
    %50 = vector.broadcast %cst_30 : f32 to vector<8x32xf32>
    %51 = vector.broadcast %cst_31 : f32 to vector<8x32xf32>
    %52 = arith.select %49, %50, %51 : vector<8x32xi1>, vector<8x32xf32>
    %53 = arith.truncf %52 : vector<8x32xf32> to vector<8x32xbf16>
    %54 = arith.truncf %24 : vector<32x8xf32> to vector<32x8xbf16>
    %cst_32 = arith.constant dense<0.000000e+00> : vector<8x8xf32>
    %55 = tpu.matmul %53, %54, %cst_32 {dimension_numbers = #tpu.dot_dimension_numbers<[1], [0], [0], [1], [0, 0, 1, 1], [], []>} : vector<8x32xbf16>, vector<32x8xbf16>, vector<8x8xf32> -> vector<8x8xf32>
    %56 = arith.truncf %34 : vector<8x8xf32> to vector<8x8xbf16>
    %c0_33 = arith.constant 0 : index
    %c0_34 = arith.constant 0 : index
    %57 = vector.load %arg10[%c0_33, %c0_34] : memref<8x8xf32, #tpu.memory_space<vmem>>, vector<8x8xf32>
    %58 = arith.truncf %57 : vector<8x8xf32> to vector<8x8xbf16>
    %cst_35 = arith.constant dense<0.000000e+00> : vector<8x8xf32>
    %59 = tpu.matmul %56, %58, %cst_35 {dimension_numbers = #tpu.dot_dimension_numbers<[1], [0], [0], [1], [0, 0, 1, 1], [], []>} : vector<8x8xbf16>, vector<8x8xbf16>, vector<8x8xf32> -> vector<8x8xf32>
    %60 = arith.truncf %45 : vector<8x8xf32> to vector<8x8xbf16>
    %c0_36 = arith.constant 0 : index
    %c0_37 = arith.constant 0 : index
    %61 = vector.load %arg11[%c0_36, %c0_37] : memref<8x8xf32, #tpu.memory_space<vmem>>, vector<8x8xf32>
    %62 = arith.truncf %61 : vector<8x8xf32> to vector<8x8xbf16>
    %cst_38 = arith.constant dense<0.000000e+00> : vector<8x8xf32>
    %63 = tpu.matmul %60, %62, %cst_38 {dimension_numbers = #tpu.dot_dimension_numbers<[1], [0], [0], [1], [0, 0, 1, 1], [], []>} : vector<8x8xbf16>, vector<8x8xbf16>, vector<8x8xf32> -> vector<8x8xf32>
    %64 = arith.addf %59, %63 : vector<8x8xf32>
    %65 = arith.truncf %55 : vector<8x8xf32> to vector<8x8xbf16>
    %c0_39 = arith.constant 0 : index
    %c0_40 = arith.constant 0 : index
    %66 = vector.load %arg12[%c0_39, %c0_40] : memref<8x8xf32, #tpu.memory_space<vmem>>, vector<8x8xf32>
    %67 = arith.truncf %66 : vector<8x8xf32> to vector<8x8xbf16>
    %cst_41 = arith.constant dense<0.000000e+00> : vector<8x8xf32>
    %68 = tpu.matmul %65, %67, %cst_41 {dimension_numbers = #tpu.dot_dimension_numbers<[1], [0], [0], [1], [0, 0, 1, 1], [], []>} : vector<8x8xbf16>, vector<8x8xbf16>, vector<8x8xf32> -> vector<8x8xf32>
    %69 = arith.addf %64, %68 : vector<8x8xf32>
    %c0_42 = arith.constant 0 : index
    %c0_43 = arith.constant 0 : index
    %70 = vector.load %arg13[%c0_42, %c0_43] : memref<1x8xf32, #tpu.memory_space<vmem>>, vector<1x8xf32>
    %71 = vector.broadcast %70 : vector<1x8xf32> to vector<8x8xf32>
    %72 = arith.addf %69, %71 : vector<8x8xf32>
    %cst_44 = arith.constant 0.000000e+00 : f32
    %73 = vector.broadcast %cst_44 : f32 to vector<8x8xf32>
    %74 = arith.maximumf %72, %73 : vector<8x8xf32>
    %c0_45 = arith.constant 0 : index
    %c0_46 = arith.constant 0 : index
    %75 = vector.load %arg14[%c0_45, %c0_46] : memref<8x8xf32, #tpu.memory_space<vmem>>, vector<8x8xf32>
    %c0_47 = arith.constant 0 : index
    %c0_48 = arith.constant 0 : index
    %76 = vector.load %arg15[%c0_47, %c0_48] : memref<1x8xf32, #tpu.memory_space<vmem>>, vector<1x8xf32>
    %c0_49 = arith.constant 0 : index
    %c0_50 = arith.constant 0 : index
    %77 = vector.load %arg16[%c0_49, %c0_50] : memref<8x128xf32, #tpu.memory_space<vmem>>, vector<8x128xf32>
    %c0_51 = arith.constant 0 : index
    %c0_52 = arith.constant 0 : index
    %78 = vector.load %arg17[%c0_51, %c0_52] : memref<1x128xf32, #tpu.memory_space<vmem>>, vector<1x128xf32>
    %79 = arith.truncf %74 : vector<8x8xf32> to vector<8x8xbf16>
    %80 = arith.truncf %75 : vector<8x8xf32> to vector<8x8xbf16>
    %cst_53 = arith.constant dense<0.000000e+00> : vector<8x8xf32>
    %81 = tpu.matmul %79, %80, %cst_53 {dimension_numbers = #tpu.dot_dimension_numbers<[1], [0], [0], [1], [0, 0, 1, 1], [], []>} : vector<8x8xbf16>, vector<8x8xbf16>, vector<8x8xf32> -> vector<8x8xf32>
    %82 = vector.broadcast %76 : vector<1x8xf32> to vector<8x8xf32>
    %83 = arith.addf %81, %82 : vector<8x8xf32>
    %cst_54 = arith.constant 0.000000e+00 : f32
    %84 = vector.broadcast %cst_54 : f32 to vector<8x8xf32>
    %85 = arith.maximumf %83, %84 : vector<8x8xf32>
    %86 = arith.truncf %85 : vector<8x8xf32> to vector<8x8xbf16>
    %87 = arith.truncf %77 : vector<8x128xf32> to vector<8x128xbf16>
    %cst_55 = arith.constant dense<0.000000e+00> : vector<8x128xf32>
    %88 = tpu.matmul %86, %87, %cst_55 {dimension_numbers = #tpu.dot_dimension_numbers<[1], [0], [0], [1], [0, 0, 1, 1], [], []>} : vector<8x8xbf16>, vector<8x128xbf16>, vector<8x128xf32> -> vector<8x128xf32>
    %89 = vector.broadcast %78 : vector<1x128xf32> to vector<8x128xf32>
    %90 = arith.addf %88, %89 : vector<8x128xf32>
    %91 = tpu.iota {dimensions = array<i32: 1>} : vector<8x128xi32>
    %c3_i32 = arith.constant 3 : i32
    %92 = vector.broadcast %c3_i32 : i32 to vector<8x128xi32>
    %93 = arith.cmpi slt, %91, %92 : vector<8x128xi32>
    %cst_56 = arith.constant 1.000000e+00 : f32
    %cst_57 = arith.constant 0.000000e+00 : f32
    %94 = vector.broadcast %cst_56 : f32 to vector<8x128xf32>
    %95 = vector.broadcast %cst_57 : f32 to vector<8x128xf32>
    %96 = arith.select %93, %94, %95 : vector<8x128xi1>, vector<8x128xf32>
    %c3_i32_58 = arith.constant 3 : i32
    %97 = vector.broadcast %c3_i32_58 : i32 to vector<8x128xi32>
    %98 = arith.cmpi eq, %91, %97 : vector<8x128xi32>
    %cst_59 = arith.constant 0.000000e+00 : f32
    %99 = vector.broadcast %cst_59 : f32 to vector<8x128xf32>
    %100 = arith.select %98, %90, %99 : vector<8x128xi1>, vector<8x128xf32>
    %cst_60 = arith.constant dense<0.000000e+00> : vector<8xf32>
    %101 = vector.multi_reduction <add>, %100, %cst_60 [1] : vector<8x128xf32> to vector<8xf32>
    %102 = vector.shape_cast %101 : vector<8xf32> to vector<8x1xf32>
    %103 = arith.mulf %90, %96 : vector<8x128xf32>
    %cst_61 = arith.constant dense<0.000000e+00> : vector<8xf32>
    %104 = vector.multi_reduction <add>, %103, %cst_61 [1] : vector<8x128xf32> to vector<8xf32>
    %105 = vector.shape_cast %104 : vector<8xf32> to vector<8x1xf32>
    %cst_62 = arith.constant 0.333333343 : f32
    %106 = vector.broadcast %cst_62 : f32 to vector<8x1xf32>
    %107 = arith.mulf %105, %106 : vector<8x1xf32>
    %108 = vector.broadcast %102 : vector<8x1xf32> to vector<8x128xf32>
    %109 = arith.addf %90, %108 : vector<8x128xf32>
    %110 = vector.broadcast %107 : vector<8x1xf32> to vector<8x128xf32>
    %111 = arith.subf %109, %110 : vector<8x128xf32>
    %c3_i32_63 = arith.constant 3 : i32
    %112 = vector.broadcast %c3_i32_63 : i32 to vector<8x128xi32>
    %113 = arith.cmpi slt, %91, %112 : vector<8x128xi32>
    %cst_64 = arith.constant 0.000000e+00 : f32
    %114 = vector.broadcast %cst_64 : f32 to vector<8x128xf32>
    %115 = arith.select %113, %111, %114 : vector<8x128xi1>, vector<8x128xf32>
    %c0_65 = arith.constant 0 : index
    %c0_66 = arith.constant 0 : index
    %116 = vector.load %arg18[%c0_65, %c0_66] : memref<8x128xf32, #tpu.memory_space<vmem>>, vector<8x128xf32>
    tpu.vector_store %arg18[%c0_65, %c0_66], %115 {strides = array<i32>} : memref<8x128xf32, #tpu.memory_space<vmem>>, vector<8x128xf32>,
    return
  }
}

</mosaic_0001>

<llo_original>
// kernel: fused_mm_forward.1
$region0: #{fused_mm_forward.1}
  #allocation0 [shape = 'u32[]', space=smem, size = 0x4, offset = 0x4, fixed_abs, tag = 'smem constant byte address 0x4 - core index']
  #allocation1 [shape = 'u32[72,128]{1,0:T(1,128)}', space=vmem, size = 0x9000, scoped, tag = 'internal scratch']
  %s0 = inlined_call_operand.vmem [shape: s32[8,1], index: 0, kind: input, shape index: {}]
  %s1 = inlined_call_operand.vmem [shape: s32[8,1], index: 1, kind: input, shape index: {}]
  %s2 = inlined_call_operand.vmem [shape: s32[8,1], index: 2, kind: input, shape index: {}]
  %s3 = inlined_call_operand.vmem [shape: f32[32,8], index: 3, kind: input, shape index: {}]
  %s4 = inlined_call_operand.vmem [shape: f32[16,8], index: 4, kind: input, shape index: {}]
  %s5 = inlined_call_operand.vmem [shape: f32[32,32], index: 5, kind: input, shape index: {}]
  %s6 = inlined_call_operand.vmem [shape: f32[8,8], index: 6, kind: input, shape index: {}]
  %s7 = inlined_call_operand.vmem [shape: f32[1,8], index: 7, kind: input, shape index: {}]
  %s8 = inlined_call_operand.vmem [shape: f32[8,8], index: 8, kind: input, shape index: {}]
  %s9 = inlined_call_operand.vmem [shape: f32[1,8], index: 9, kind: input, shape index: {}]
  %s10 = inlined_call_operand.vmem [shape: f32[8,8], index: 10, kind: input, shape index: {}]
  %s11 = inlined_call_operand.vmem [shape: f32[8,8], index: 11, kind: input, shape index: {}]
  %s12 = inlined_call_operand.vmem [shape: f32[8,8], index: 12, kind: input, shape index: {}]
  %s13 = inlined_call_operand.vmem [shape: f32[1,8], index: 13, kind: input, shape index: {}]
  %s14 = inlined_call_operand.hbm [shape: f32[8,8], index: 14, kind: input, shape index: {}]
  %s15 = inlined_call_operand.vmem [shape: f32[1,8], index: 15, kind: input, shape index: {}]
  %s16 = inlined_call_operand.vmem [shape: f32[8,128], index: 16, kind: input, shape index: {}]
  %s17 = inlined_call_operand.vmem [shape: f32[1,128], index: 17, kind: input, shape index: {}]
  %s18 = inlined_call_operand.vmem [shape: f32[8,128], index: 18, kind: output, shape index: {}]
  %s19 = sld [smem:[#allocation0]]
  $region86: #{fused_mm_forward.1} parent=0
    _
  %s21 = ssub.s32 1, %s19
  %s22 = scalar_select 0, %s21, %s19
  $region1: #{fused_mm_forward.1} parent=0
    #allocation2 [shape = 'u8[4096]{0}', space=vmem, size = 0x1000, scoped, tag = 'input window, operand 14, single buffered']
    #allocation3 [shape = 's32[1]{0}', space=sflag, size = 0x4, scoped, tag = 'scoped memory for fused_mm_forward.1']
    %23 = vsyncpa [#allocation3], 0
    // Predicated region
    $region2: #{fused_mm_forward.1} parent=1 // pred_check
      _
    $region3: #{fused_mm_forward.1} parent=1 // pred_check_branch
      %25 = sbr.rel (0) target = $region5
    $region4: #{fused_mm_forward.1} parent=1 // pred_region
      _
    $region5: #{fused_mm_forward.1} parent=1 // pred_fallthru
      _
    // Predicated region
    $region6: #{fused_mm_forward.1} parent=1 // pred_check
      _
    $region7: #{fused_mm_forward.1} parent=1 // pred_check_branch
      %27 = sbr.rel (0) target = $region9
    $region8: #{fused_mm_forward.1} parent=1 // pred_region
      _
    $region9: #{fused_mm_forward.1} parent=1 // pred_fallthru
      _
    // Predicated region
    $region10: #{fused_mm_forward.1} parent=1 // pred_check
      _
    $region11: #{fused_mm_forward.1} parent=1 // pred_check_branch
      %29 = sbr.rel (0) target = $region13
    $region12: #{fused_mm_forward.1} parent=1 // pred_region
      _
    $region13: #{fused_mm_forward.1} parent=1 // pred_fallthru
      _
    // Predicated region
    $region14: #{fused_mm_forward.1} parent=1 // pred_check
      _
    $region15: #{fused_mm_forward.1} parent=1 // pred_check_branch
      %31 = sbr.rel (0) target = $region17
    $region16: #{fused_mm_forward.1} parent=1 // pred_region
      _
    $region17: #{fused_mm_forward.1} parent=1 // pred_fallthru
      _
    // Predicated region
    $region18: #{fused_mm_forward.1} parent=1 // pred_check
      _
    $region19: #{fused_mm_forward.1} parent=1 // pred_check_branch
      %33 = sbr.rel (0) target = $region21
    $region20: #{fused_mm_forward.1} parent=1 // pred_region
      _
    $region21: #{fused_mm_forward.1} parent=1 // pred_fallthru
      _
    // Predicated region
    $region22: #{fused_mm_forward.1} parent=1 // pred_check
      _
    $region23: #{fused_mm_forward.1} parent=1 // pred_check_branch
      %35 = sbr.rel (0) target = $region25
    $region24: #{fused_mm_forward.1} parent=1 // pred_region
      _
    $region25: #{fused_mm_forward.1} parent=1 // pred_fallthru
      _
    // Predicated region
    $region26: #{fused_mm_forward.1} parent=1 // pred_check
      _
    $region27: #{fused_mm_forward.1} parent=1 // pred_check_branch
      %37 = sbr.rel (0) target = $region29
    $region28: #{fused_mm_forward.1} parent=1 // pred_region
      _
    $region29: #{fused_mm_forward.1} parent=1 // pred_fallthru
      _
    // Predicated region
    $region30: #{fused_mm_forward.1} parent=1 // pred_check
      _
    $region31: #{fused_mm_forward.1} parent=1 // pred_check_branch
      %39 = sbr.rel (0) target = $region33
    $region32: #{fused_mm_forward.1} parent=1 // pred_region
      _
    $region33: #{fused_mm_forward.1} parent=1 // pred_fallthru
      _
    // Predicated region
    $region34: #{fused_mm_forward.1} parent=1 // pred_check
      _
    $region35: #{fused_mm_forward.1} parent=1 // pred_check_branch
      %41 = sbr.rel (0) target = $region37
    $region36: #{fused_mm_forward.1} parent=1 // pred_region
      _
    $region37: #{fused_mm_forward.1} parent=1 // pred_fallthru
      _
    // Predicated region
    $region38: #{fused_mm_forward.1} parent=1 // pred_check
      _
    $region39: #{fused_mm_forward.1} parent=1 // pred_check_branch
      %43 = sbr.rel (0) target = $region41
    $region40: #{fused_mm_forward.1} parent=1 // pred_region
      _
    $region41: #{fused_mm_forward.1} parent=1 // pred_fallthru
      _
    // Predicated region
    $region42: #{fused_mm_forward.1} parent=1 // pred_check
      _
    $region43: #{fused_mm_forward.1} parent=1 // pred_check_branch
      %45 = sbr.rel (0) target = $region45
    $region44: #{fused_mm_forward.1} parent=1 // pred_region
      _
    $region45: #{fused_mm_forward.1} parent=1 // pred_fallthru
      _
    // Predicated region
    $region46: #{fused_mm_forward.1} parent=1 // pred_check
      _
    $region47: #{fused_mm_forward.1} parent=1 // pred_check_branch
      %47 = sbr.rel (0) target = $region49
    $region48: #{fused_mm_forward.1} parent=1 // pred_region
      _
    $region49: #{fused_mm_forward.1} parent=1 // pred_fallthru
      _
    // Predicated region
    $region50: #{fused_mm_forward.1} parent=1 // pred_check
      _
    $region51: #{fused_mm_forward.1} parent=1 // pred_check_branch
      %49 = sbr.rel (0) target = $region53
    $region52: #{fused_mm_forward.1} parent=1 // pred_region
      _
    $region53: #{fused_mm_forward.1} parent=1 // pred_fallthru
      _
    // Predicated region
    $region54: #{fused_mm_forward.1} parent=1 // pred_check
      _
    $region55: #{fused_mm_forward.1} parent=1 // pred_check_branch
      %51 = sbr.rel (0) target = $region57
    $region56: #{fused_mm_forward.1} parent=1 // pred_region
      _
    $region57: #{fused_mm_forward.1} parent=1 // pred_fallthru
      _
    // Predicated region
    $region58: #{fused_mm_forward.1} parent=1 // pred_check
      _
    $region59: #{fused_mm_forward.1} parent=1 // pred_check_branch
      %53 = sbr.rel (0) target = $region61
    $region60: #{fused_mm_forward.1} parent=1 // pred_region
      %55 = vsyncadd [#allocation3], 0
      %s57 = sshll.u32 %s14, 4
      %s58 = int_to_ptr.hbm [resolvable:$true] %s57
      %s59 = sshll.u32 [#allocation2], 4
      %s60 = int_to_ptr.vmem [resolvable:$true] %s59
      %62 = dma.hbm_to_vmem [thread:$0]  %s58, 128, %s60, [#allocation3]
    $region61: #{fused_mm_forward.1} parent=1 // pred_fallthru
      _
    // Predicated region
    $region62: #{fused_mm_forward.1} parent=1 // pred_check
      _
    $region63: #{fused_mm_forward.1} parent=1 // pred_check_branch
      %64 = sbr.rel (0) target = $region65
    $region64: #{fused_mm_forward.1} parent=1 // pred_region
      _
    $region65: #{fused_mm_forward.1} parent=1 // pred_fallthru
      _
    // Predicated region
    $region66: #{fused_mm_forward.1} parent=1 // pred_check
      _
    $region67: #{fused_mm_forward.1} parent=1 // pred_check_branch
      %66 = sbr.rel (0) target = $region69
    $region68: #{fused_mm_forward.1} parent=1 // pred_region
      _
    $region69: #{fused_mm_forward.1} parent=1 // pred_fallthru
      _
    // Predicated region
    $region70: #{fused_mm_forward.1} parent=1 // pred_check
      _
    $region71: #{fused_mm_forward.1} parent=1 // pred_check_branch
      %68 = sbr.rel (0) target = $region73
    $region72: #{fused_mm_forward.1} parent=1 // pred_region
      _
    $region73: #{fused_mm_forward.1} parent=1 // pred_fallthru
      _
    // Predicated region
    $region74: #{fused_mm_forward.1} parent=1 // pred_check
      _
    $region75: #{fused_mm_forward.1} parent=1 // pred_check_branch
      %70 = sbr.rel (0) target = $region77
    $region76: #{fused_mm_forward.1} parent=1 // pred_region
      %72 = dma.done [#allocation3], 128
    $region77: #{fused_mm_forward.1} parent=1 // pred_fallthru
      _
    %v74 = vld [vmem:[%s3] sm:$0xff]
    %v75 = vld [vmem:[%s3 + $0x8] sm:$0xff]
    %v76 = vld [vmem:[%s3 + $0x10] sm:$0xff]
    %v77 = vld [vmem:[%s3 + $0x18] sm:$0xff]
    %v78 = vld [vmem:[%s5] sm:$0xff]
    %v79 = vld [vmem:[%s5 + $0x8] sm:$0xff]
    %v80 = vld [vmem:[%s5 + $0x10] sm:$0xff]
    %v81 = vld [vmem:[%s5 + $0x18] sm:$0xff]
    %v82 = vld [vmem:[%s6] sm:$0xff]
    %v83 = vld [vmem:[%s7] sm:$0x1]
    %v84 = vld [vmem:[%s8] sm:$0xff]
    %v85 = vld [vmem:[%s9] sm:$0x1]
    %v86 = vpack.c.bf16 %v79, %v78
    %v87 = vpack.c.bf16 %v81, %v80
    %v88 = vpack.c.bf16 %v75, %v74
    %v89 = vpack.c.bf16 %v77, %v76
    %v90 = vpack.c.bf16 %v82, %v82
    %vm91 = vcmask 64512
    %v93 = vsel %vm91, %v88, 0
    %v96 = vsel %vm91, %v89, 0
    %vm98 = vcmask 1043456
    %v100 = vsel %vm98, %v90, 0
    %102 = vmatpush.bf16.msra.mxu0 0
    %103 = vmatpush.bf16.msra.mxu0 0
    %104 = vmatpush.bf16.msra.mxu0 0
    %105 = vmatpush.bf16.msra.mxu0 0
    %106 = vmatpush.bf16.msra.mxu0 0
    %107 = vmatpush.bf16.msra.mxu0 0
    %108 = vmatpush.bf16.msra.mxu0 0
    %109 = vmatpush.bf16.msra.mxu0 %v100
    %110 = vmatmul.bf16.gmra.mxu0 %v93
    %v111 = vpop.f32.mrf.mxu0
    %v112 = vadd.f32 0.0, %v111
    %v113 = vpop.f32.mrf.mxu0
    %v114 = vadd.f32 0.0, %v113
    %115 = vmatmul.bf16.gmra.mxu0 %v96
    %v116 = vpop.f32.mrf.mxu0
    %v117 = vadd.f32 0.0, %v116
    %v118 = vpop.f32.mrf.mxu0
    %v119 = vadd.f32 0.0, %v118
    %120 = vdwg.mxu0
    %v121 = vpack.c.bf16 %v114, %v112
    %v122 = vpack.c.bf16 %v119, %v117
    %v124 = vperm.slane %v83, 0
    %vm126 = vcmask 261120
    %v128 = vsel %vm126, %v86, 0
    %v131 = vsel %vm126, %v87, 0
    %133 = vmatpush.bf16.msra.mxu0 0
    %134 = vmatpush.bf16.msra.mxu0 0
    %135 = vmatpush.bf16.msra.mxu0 0
    %136 = vmatpush.bf16.msra.mxu0 0
    %137 = vmatpush.bf16.msra.mxu0 0
    %138 = vmatpush.bf16.msra.mxu0 0
    %139 = vmatpush.bf16.msra.mxu0 %v122
    %140 = vmatpush.bf16.msra.mxu0 %v121
    %141 = vmatmul.bf16.gmra.mxu0 %v128
    %v142 = vpop.f32.mrf.mxu0
    %v143 = vadd.f32 %v124, %v142
    %v144 = vpop.f32.mrf.mxu0
    %v145 = vadd.f32 %v124, %v144
    %146 = vmatmul.bf16.gmra.mxu0 %v131
    %v147 = vpop.f32.mrf.mxu0
    %v148 = vadd.f32 %v124, %v147
    %v149 = vpop.f32.mrf.mxu0
    %v150 = vadd.f32 %v124, %v149
    %151 = vdwg.mxu0
    %v152 = vmax.f32 %v143, 0.0
    %v153 = vmax.f32 %v145, 0.0
    %v154 = vmax.f32 %v148, 0.0
    %v155 = vmax.f32 %v150, 0.0
    %v156 = vpack.c.bf16 %v153, %v152
    %v157 = vpack.c.bf16 %v155, %v154
    %v158 = vpack.c.bf16 %v84, %v84
    %v160 = vsel %vm91, %v156, 0
    %v163 = vsel %vm91, %v157, 0
    %v166 = vsel %vm98, %v158, 0
    %168 = vmatpush.bf16.msra.mxu0 0
    %169 = vmatpush.bf16.msra.mxu0 0
    %170 = vmatpush.bf16.msra.mxu0 0
    %171 = vmatpush.bf16.msra.mxu0 0
    %172 = vmatpush.bf16.msra.mxu0 0
    %173 = vmatpush.bf16.msra.mxu0 0
    %174 = vmatpush.bf16.msra.mxu0 0
    %175 = vmatpush.bf16.msra.mxu0 %v166
    %176 = vmatmul.bf16.gmra.mxu0 %v160
    %v177 = vpop.f32.mrf.mxu0
    %v178 = vadd.f32 0.0, %v177
    %v179 = vpop.f32.mrf.mxu0
    %v180 = vadd.f32 0.0, %v179
    %181 = vmatmul.bf16.gmra.mxu0 %v163
    %v182 = vpop.f32.mrf.mxu0
    %v183 = vadd.f32 0.0, %v182
    %v184 = vpop.f32.mrf.mxu0
    %v185 = vadd.f32 0.0, %v184
    %186 = vdwg.mxu0
    %v187 = vpack.c.bf16 %v180, %v178
    %v188 = vpack.c.bf16 %v185, %v183
    %v190 = vperm.slane %v85, 0
    %192 = vmatpush.bf16.msra.mxu0 0
    %193 = vmatpush.bf16.msra.mxu0 0
    %194 = vmatpush.bf16.msra.mxu0 0
    %195 = vmatpush.bf16.msra.mxu0 0
    %196 = vmatpush.bf16.msra.mxu0 0
    %197 = vmatpush.bf16.msra.mxu0 0
    %198 = vmatpush.bf16.msra.mxu0 %v188
    %199 = vmatpush.bf16.msra.mxu0 %v187
    %200 = vmatmul.bf16.gmra.mxu0 %v128
    %v201 = vpop.f32.mrf.mxu0
    %v202 = vadd.f32 %v190, %v201
    %v203 = vpop.f32.mrf.mxu0
    %v204 = vadd.f32 %v190, %v203
    %205 = vmatmul.bf16.gmra.mxu0 %v131
    %v206 = vpop.f32.mrf.mxu0
    %v207 = vadd.f32 %v190, %v206
    %v208 = vpop.f32.mrf.mxu0
    %v209 = vadd.f32 %v190, %v208
    %210 = vdwg.mxu0
    %v211 = vmax.f32 %v202, 0.0
    %v212 = vmax.f32 %v204, 0.0
    %v213 = vmax.f32 %v207, 0.0
    %v214 = vmax.f32 %v209, 0.0
    %v215 = vld [vmem:[%s0] sm:$0xff]
    %v216 = vlaneseq
    %v217 = vand.u32 %v216, 127
    %218 = vset.pattern.permute.xlu0 0
    %219 = vperm.xlu0 %218, %v215
    %v220 = vpop.permute.xlu0 %219
    %vm221 = vcmp.eq.s32.totalorder %v217, %v220
    %v222 = vsel %vm221, 1.0, 0.0
    %v223 = vpack.c.bf16 %v222, %v222
    %v224 = vpack.c.bf16 %v212, %v211
    %v225 = vpack.c.bf16 %v214, %v213
    %v227 = vsel %vm126, %v223, 0
    %229 = vmatpush.bf16.msra.mxu0 0
    %230 = vmatpush.bf16.msra.mxu0 0
    %231 = vmatpush.bf16.msra.mxu0 0
    %232 = vmatpush.bf16.msra.mxu0 0
    %233 = vmatpush.bf16.msra.mxu0 0
    %234 = vmatpush.bf16.msra.mxu0 0
    %235 = vmatpush.bf16.msra.mxu0 %v225
    %236 = vmatpush.bf16.msra.mxu0 %v224
    %237 = vmatmul.bf16.gmra.mxu0 %v227
    %v238 = vpop.f32.mrf.mxu0
    %v239 = vadd.f32 0.0, %v238
    %v240 = vpop.f32.mrf.mxu0
    %241 = vdwg.mxu0
    %v242 = vld [vmem:[%s1] sm:$0xff]
    %v243 = vld [vmem:[%s4] sm:$0xff]
    %v244 = vld [vmem:[%s4 + $0x8] sm:$0xff]
    %245 = vset.pattern.permute.xlu0 0
    %246 = vperm.xlu0 %245, %v242
    %v247 = vpop.permute.xlu0 %246
    %vm248 = vcmp.eq.s32.totalorder %v217, %v247
    %v249 = vsel %vm248, 1.0, 0.0
    %v250 = vpack.c.bf16 %v249, %v249
    %v251 = vpack.c.bf16 %v244, %v243
    %vm252 = vcmask 130048
    %v254 = vsel %vm252, %v250, 0
    %256 = vmatpush.bf16.msra.mxu0 0
    %257 = vmatpush.bf16.msra.mxu0 0
    %258 = vmatpush.bf16.msra.mxu0 0
    %259 = vmatpush.bf16.msra.mxu0 0
    %260 = vmatpush.bf16.msra.mxu0 0
    %261 = vmatpush.bf16.msra.mxu0 0
    %262 = vmatpush.bf16.msra.mxu0 0
    %263 = vmatpush.bf16.msra.mxu0 %v251
    %264 = vmatmul.bf16.gmra.mxu0 %v254
    %v265 = vpop.f32.mrf.mxu0
    %v266 = vadd.f32 0.0, %v265
    %v267 = vpop.f32.mrf.mxu0
    %268 = vdwg.mxu0
    %v269 = vld [vmem:[%s2] sm:$0xff]
    %270 = vset.pattern.permute.xlu0 0
    %271 = vperm.xlu0 %270, %v269
    %v272 = vpop.permute.xlu0 %271
    %vm273 = vcmp.eq.s32.totalorder %v217, %v272
    %v274 = vsel %vm273, 1.0, 0.0
    %v275 = vpack.c.bf16 %v274, %v274
    %v277 = vsel %vm126, %v275, 0
    %279 = vmatpush.bf16.msra.mxu0 0
    %280 = vmatpush.bf16.msra.mxu0 0
    %281 = vmatpush.bf16.msra.mxu0 0
    %282 = vmatpush.bf16.msra.mxu0 0
    %283 = vmatpush.bf16.msra.mxu0 0
    %284 = vmatpush.bf16.msra.mxu0 0
    %285 = vmatpush.bf16.msra.mxu0 %v225
    %286 = vmatpush.bf16.msra.mxu0 %v224
    %287 = vmatmul.bf16.gmra.mxu0 %v277
    %v288 = vpop.f32.mrf.mxu0
    %v289 = vadd.f32 0.0, %v288
    %v290 = vpop.f32.mrf.mxu0
    %291 = vdwg.mxu0
    %v292 = vpack.c.bf16 %v239, %v239
    %v293 = vld [vmem:[%s10] sm:$0xff]
    %v294 = vpack.c.bf16 %v293, %v293
    %v295 = vpack.c.bf16 %v266, %v266
    %v296 = vld [vmem:[%s11] sm:$0xff]
    %v297 = vpack.c.bf16 %v296, %v296
    %v299 = vsel %vm91, %v295, 0
    %v302 = vsel %vm98, %v297, 0
    %304 = vmatpush.bf16.msra.mxu0 0
    %305 = vmatpush.bf16.msra.mxu0 0
    %306 = vmatpush.bf16.msra.mxu0 0
    %307 = vmatpush.bf16.msra.mxu0 0
    %308 = vmatpush.bf16.msra.mxu0 0
    %309 = vmatpush.bf16.msra.mxu0 0
    %310 = vmatpush.bf16.msra.mxu0 0
    %311 = vmatpush.bf16.msra.mxu0 %v302
    %312 = vmatmul.bf16.gmra.mxu0 %v299
    %v313 = vpop.f32.mrf.mxu0
    %v314 = vadd.f32 0.0, %v313
    %v315 = vpop.f32.mrf.mxu0
    %316 = vdwg.mxu0
    %v318 = vsel %vm91, %v292, 0
    %v321 = vsel %vm98, %v294, 0
    %323 = vmatpush.bf16.msra.mxu0 0
    %324 = vmatpush.bf16.msra.mxu0 0
    %325 = vmatpush.bf16.msra.mxu0 0
    %326 = vmatpush.bf16.msra.mxu0 0
    %327 = vmatpush.bf16.msra.mxu0 0
    %328 = vmatpush.bf16.msra.mxu0 0
    %329 = vmatpush.bf16.msra.mxu0 0
    %330 = vmatpush.bf16.msra.mxu0 %v321
    %331 = vmatmul.bf16.gmra.mxu0 %v318
    %v332 = vpop.f32.mrf.mxu0
    %v333 = vadd.f32 %v314, %v332
    %v334 = vpop.f32.mrf.mxu0
    %335 = vdwg.mxu0
    %v336 = vpack.c.bf16 %v289, %v289
    %v337 = vld [vmem:[%s12] sm:$0xff]
    %v338 = vpack.c.bf16 %v337, %v337
    %v340 = vsel %vm91, %v336, 0
    %v343 = vsel %vm98, %v338, 0
    %345 = vmatpush.bf16.msra.mxu0 0
    %346 = vmatpush.bf16.msra.mxu0 0
    %347 = vmatpush.bf16.msra.mxu0 0
    %348 = vmatpush.bf16.msra.mxu0 0
    %349 = vmatpush.bf16.msra.mxu0 0
    %350 = vmatpush.bf16.msra.mxu0 0
    %351 = vmatpush.bf16.msra.mxu0 0
    %352 = vmatpush.bf16.msra.mxu0 %v343
    %353 = vmatmul.bf16.gmra.mxu0 %v340
    %v354 = vpop.f32.mrf.mxu0
    %v355 = vadd.f32 0.0, %v354
    %v356 = vpop.f32.mrf.mxu0
    %357 = vdwg.mxu0
    %v358 = vadd.f32 %v333, %v355
    %v359 = vld [vmem:[%s13] sm:$0x1]
    %v361 = vperm.slane %v359, 0
    %v363 = vadd.f32 %v358, %v361
    %v364 = vmax.f32 %v363, 0.0
    %v365 = vld [vmem:[#allocation2] sm:$0xff]
    %v366 = vld [vmem:[%s15] sm:$0x1]
    %v367 = vld [vmem:[%s16] sm:$0xff]
    %v368 = vld [vmem:[%s17] sm:$0x1]
    %v369 = vpack.c.bf16 %v364, %v364
    %v370 = vpack.c.bf16 %v365, %v365
    %v372 = vperm.slane %v366, 0
    %v375 = vsel %vm91, %v369, 0
    %v378 = vsel %vm98, %v370, 0
    %380 = vmatpush.bf16.msra.mxu0 0
    %381 = vmatpush.bf16.msra.mxu0 0
    %382 = vmatpush.bf16.msra.mxu0 0
    %383 = vmatpush.bf16.msra.mxu0 0
    %384 = vmatpush.bf16.msra.mxu0 0
    %385 = vmatpush.bf16.msra.mxu0 0
    %386 = vmatpush.bf16.msra.mxu0 0
    %387 = vmatpush.bf16.msra.mxu0 %v378
    %388 = vmatmul.bf16.gmra.mxu0 %v375
    %v389 = vpop.f32.mrf.mxu0
    %v390 = vadd.f32 %v372, %v389
    %v391 = vpop.f32.mrf.mxu0
    %392 = vdwg.mxu0
    %v393 = vmax.f32 %v390, 0.0
    %v394 = vpack.c.bf16 %v393, %v393
    %v395 = vpack.c.bf16 %v367, %v367
    %v397 = vperm.slane %v368, 0
    %v400 = vsel %vm91, %v394, 0
    %v403 = vsel %vm98, %v395, 0
    %405 = vmatpush.bf16.msra.mxu0 0
    %406 = vmatpush.bf16.msra.mxu0 0
    %407 = vmatpush.bf16.msra.mxu0 0
    %408 = vmatpush.bf16.msra.mxu0 0
    %409 = vmatpush.bf16.msra.mxu0 0
    %410 = vmatpush.bf16.msra.mxu0 0
    %411 = vmatpush.bf16.msra.mxu0 0
    %412 = vmatpush.bf16.msra.mxu0 %v403
    %413 = vmatmul.bf16.gmra.mxu0 %v400
    %v414 = vpop.f32.mrf.mxu0
    %v415 = vadd.f32 %v397, %v414
    %v416 = vpop.f32.mrf.mxu0
    %417 = vdwg.mxu0
    %vm418 = vcmp.lt.s32.totalorder %v217, 3
    %v419 = vsel %vm418, 1.0, 0.0
    %vm420 = vcmp.eq.s32.totalorder %v217, 3
    %v421 = vsel %vm420, %v415, 0.0
    %422 = vadd.xlane.f32.xlu0 %v421
    %v423 = vpop.xlane.xlu0 %422
    %v424 = vmul.f32 %v415, %v419
    %425 = vadd.xlane.f32.xlu0 %v424
    %v426 = vpop.xlane.xlu0 %425
    %v427 = vmul.f32 %v426, 0.33333334
    %v428 = vadd.f32 %v415, %v423
    %v429 = vsub.f32 %v428, %v427
    %v430 = vsel %vm418, %v429, 0.0
    %431 = vst [vmem:[%s18] sm:$0xff] %v430
    // Predicated region
    $region78: #{fused_mm_forward.1} parent=1 // pred_check
      _
    $region79: #{fused_mm_forward.1} parent=1 // pred_check_branch
      %433 = sbr.rel (0) target = $region81
    $region80: #{fused_mm_forward.1} parent=1 // pred_region
      _
    $region81: #{fused_mm_forward.1} parent=1 // pred_fallthru
      _
    // Predicated region
    $region82: #{fused_mm_forward.1} parent=1 // pred_check
      _
    $region83: #{fused_mm_forward.1} parent=1 // pred_check_branch
      %435 = sbr.rel (0) target = $region85
    $region84: #{fused_mm_forward.1} parent=1 // pred_region
      _
    $region85: #{fused_mm_forward.1} parent=1 // pred_fallthru
      _
    %436 = vsyncpa [#allocation3], 1

</llo_original>
